<compile_context>
chip_gen: v5e
topology: v5e:2x2
jax: 0.10.0
libtpu: 0.0.40
codegen_flags: <defaults>
</compile_context>

<pallas_src>
import functools

import jax
import jax.numpy as jnp
from jax.experimental import pallas as pl
from jax.experimental.pallas import tpu as pltpu

LANE = 128                 # lane (last-dim) alignment for hidden feature dims
SUBLANE = 16               # batch-tile sublane alignment (safe for f32 and bf16)
TARGET_BATCH_TILE = 1024   # rows per grid step; amortizes per-step overhead
SPLIT_BATCH_ABOVE = 256    # force >=2 grid steps above this (v7x megacore sharding)


def _round_up(x, m):
    return ((x + m - 1) // m) * m


def _cdiv(a, b):
    return (a + b - 1) // b


def _fused_mlp_kernel(num_linear, compute_dtype, *refs):
    """refs = (obs_ref, w0, b0, w1, b1, ..., w_{L-1}, b_{L-1}, out_ref)."""
    obs_ref = refs[0]
    out_ref = refs[-1]
    wb = refs[1:-1]

    x = obs_ref[...].astype(compute_dtype)            # (TB, ob_dim)
    for i in range(num_linear):
        w = wb[2 * i][...]                             # (d_in, d_out), resident, bf16/f32
        b = wb[2 * i + 1][...]                         # (1, d_out), f32
        y = jnp.dot(x, w, preferred_element_type=jnp.float32) + b   # MXU, f32 accumulate
        if i < num_linear - 1:
            y = jnp.tanh(y)                            # EUP slot; output layer = identity
            x = y.astype(compute_dtype)
        else:
            x = y
    out_ref[...] = x.astype(out_ref.dtype)


def prepare_mlp_params(weights, biases, *, param_dtype=jnp.bfloat16):
    """Pad/cast parameters ONCE at load time (hoisted out of the per-call path).

    weights[i] is (d_in, d_out) — i.e. transposed once from PyTorch's (out, in) Linear
    layout — so the kernel computes y = x @ W + b with no XLU transposes.  Hidden dims
    are zero-padded to 128 lanes; ob_dim (input) and ac_dim (output) stay exact so the
    obs/out HBM slabs carry only real bytes.
    """
    num_linear = len(weights)
    dims = [weights[0].shape[0]] + [w.shape[1] for w in weights]
    dims_p = list(dims)
    for i in range(1, num_linear):                     # pad only internal boundaries
        dims_p[i] = _round_up(dims[i], LANE)

    flat_wb = []
    for i, (w, b) in enumerate(zip(weights, biases)):
        din, dout = dims_p[i], dims_p[i + 1]
        wp = jnp.zeros((din, dout), param_dtype).at[: w.shape[0], : w.shape[1]].set(
            w.astype(param_dtype))
        bp = jnp.zeros((1, dout), jnp.float32).at[0, : b.shape[0]].set(
            b.astype(jnp.float32))
        flat_wb.extend((wp, bp))

    return dict(flat_wb=tuple(flat_wb), dims=tuple(dims), dims_p=tuple(dims_p),
                param_dtype=param_dtype)


def mlp_policy_forward(obs, params, logstd):
    """Continuous (non-deterministic) MLPPolicy.forward.

    Returns (batch_mean, scale_tril) — the parameters of the MultivariateNormal
    action distribution.
    """
    flat_wb = params["flat_wb"]
    dims = params["dims"]
    dims_p = params["dims_p"]
    param_dtype = params["param_dtype"]
    num_linear = len(flat_wb) // 2

    B, ob_dim = obs.shape
    assert ob_dim == dims[0], (ob_dim, dims[0])
    ac_dim = dims[-1]
    f32 = jnp.float32

    # ---- Batch tiling: big tiles, minimal b_pad inflation, >=2 steps for megacore.
    n_tiles = _cdiv(B, TARGET_BATCH_TILE)
    if B > SPLIT_BATCH_ABOVE:
        n_tiles = max(n_tiles, 2)
    tb = _round_up(_cdiv(B, n_tiles), SUBLANE)
    b_pad = tb * n_tiles
    grid = (n_tiles,)

    obs_p = obs.astype(f32)
    if b_pad > B:
        obs_p = jnp.pad(obs_p, ((0, b_pad - B), (0, 0)))

    # ---- Cost estimate (real, unpadded work) for the XLA scheduler.
    flops = 2 * B * sum(dims[i] * dims[i + 1] for i in range(num_linear))
    transcendentals = B * sum(dims[1:-1])
    bytes_accessed = (obs.size * 4 + B * ac_dim * 4
                      + sum(int(a.size) * a.dtype.itemsize for a in flat_wb))
    cost = pl.CostEstimate(flops=flops, transcendentals=transcendentals,
                           bytes_accessed=bytes_accessed)

    # ---- VMEM budget: single-buffered params + double-buffered obs/out + activations,
    # capped against the actual device VMEM capacity (v7x has only 64 MiB).
    w_itemsize = jnp.dtype(param_dtype).itemsize
    w_bytes = sum(dims_p[i] * dims_p[i + 1] for i in range(num_linear)) * w_itemsize
    b_bytes = sum(dims_p[1:]) * 4
    io_bytes = 2 * tb * (dims_p[0] + dims_p[-1]) * 4
    act_bytes = 3 * tb * max(dims_p) * 4
    try:
        vmem_cap = int(0.85 * pltpu.get_tpu_info().vmem_capacity_bytes)
    except Exception:
        vmem_cap = int(0.85 * (64 << 20))   # conservative: v7x physical VMEM

    # TODO(synk): if w_bytes (single-buffered, bf16) ever exceeds ~60% of vmem_cap the
    # weight-resident design stops fitting (first on v7x); that regime needs a K-tiled
    # grid axis with a pl.when-initialized accumulator instead of full residency.

    def _call(single_buffer_params):
        resident_kw = ({"pipeline_mode": pl.Buffered(1)} if single_buffer_params else {})
        in_specs = [pl.BlockSpec((tb, dims_p[0]), lambda i: (i, 0))]
        for li in range(num_linear):
            in_specs.append(pl.BlockSpec((dims_p[li], dims_p[li + 1]),
                                         lambda i: (0, 0), **resident_kw))
            in_specs.append(pl.BlockSpec((1, dims_p[li + 1]),
                                         lambda i: (0, 0), **resident_kw))
        out_spec = pl.BlockSpec((tb, dims_p[-1]), lambda i: (i, 0))

        est = (1 if single_buffer_params else 2) * (w_bytes + b_bytes) + io_bytes + act_bytes
        vmem_limit = (min(int(1.25 * est) + (4 << 20), vmem_cap)
                      if est > (24 << 20) else None)

        kernel = functools.partial(_fused_mlp_kernel, num_linear, param_dtype)
        return pl.pallas_call(
            kernel,
            out_shape=jax.ShapeDtypeStruct((b_pad, dims_p[-1]), f32),
            grid_spec=pltpu.PrefetchScalarGridSpec(
                num_scalar_prefetch=0,
                grid=grid,
                in_specs=in_specs,
                out_specs=out_spec,
            ),
            compiler_params=pltpu.CompilerParams(
                dimension_semantics=("parallel",),
                vmem_limit_bytes=vmem_limit,
            ),
            cost_estimate=cost,
        )(obs_p, *flat_wb)

    try:
        # Preferred: single-buffer the grid-invariant weights/biases (halves residency).
        out_p = jax.block_until_ready(_call(True))
    except Exception:
        # Safe fallback if this jax build rejects pl.Buffered(1) on the main pipeline.
        out_p = _call(False)

    batch_mean = out_p[:B, :]   # (B, ac_dim); only padded batch rows to drop

    # TODO(synk): the MultivariateNormal distribution object (sampling / log_prob) has
    # no Pallas equivalent; we return its parameters (batch_mean, scale_tril) instead.
    scale_tril = jnp.diag(jnp.exp(logstd.astype(f32)))
    return batch_mean, scale_tril


def _reference_mean(obs, weights, biases, cast_dtype=None):
    """Pure-JAX reference. cast_dtype=bf16 mimics the kernel's MXU-input numerics."""
    x = obs.astype(jnp.float32)
    for i, (w, b) in enumerate(zip(weights, biases)):
        wf = w.astype(jnp.float32)
        if cast_dtype is not None:
            x = x.astype(cast_dtype)
            wf = w.astype(cast_dtype)
        x = jnp.dot(x, wf, preferred_element_type=jnp.float32,
                    precision=jax.lax.Precision.HIGHEST) + b.astype(jnp.float32)
        if i < len(weights) - 1:
            x = jnp.tanh(x)
    return x


if __name__ == "__main__":
    # Small shapes consistent with the module: B=16, ob_dim=4, ac_dim=2, n_layers=2, size=32.
    B, ob_dim, ac_dim, n_layers, size = 16, 4, 2, 2, 32
    dims = [ob_dim] + [size] * n_layers + [ac_dim]
    num_linear = n_layers + 1

    key = jax.random.PRNGKey(0)
    keys = jax.random.split(key, 2 * num_linear + 1)

    weights, biases = [], []
    k_idx = 0
    for i in range(num_linear):
        w = jax.random.normal(keys[k_idx], (dims[i], dims[i + 1]), jnp.float32)
        w = w / jnp.sqrt(jnp.float32(dims[i]))
        k_idx += 1
        b = 0.01 * jax.random.normal(keys[k_idx], (dims[i + 1],), jnp.float32)
        k_idx += 1
        weights.append(w)
        biases.append(b)
    obs = jax.random.normal(keys[k_idx], (B, ob_dim), jnp.float32)
    logstd = jnp.zeros((ac_dim,), jnp.float32)   # matches nn.Parameter(torch.zeros(ac_dim))

    # Parameters are padded / cast to bf16 ONCE here (hoisted out of the forward path).
    params = prepare_mlp_params(weights, biases, param_dtype=jnp.bfloat16)

    batch_mean, scale_tril = mlp_policy_forward(obs, params, logstd)
    batch_mean = jax.block_until_ready(batch_mean)
    scale_tril = jax.block_until_ready(scale_tril)

    assert batch_mean.shape == (B, ac_dim), batch_mean.shape
    assert scale_tril.shape == (ac_dim, ac_dim), scale_tril.shape

    # Check against a reference with matching bf16-MXU-input numerics (tight)...
    ref_bf16 = _reference_mean(obs, weights, biases, cast_dtype=jnp.bfloat16)
    assert jnp.allclose(batch_mean, ref_bf16, rtol=5e-3, atol=5e-3), (
        float(jnp.max(jnp.abs(batch_mean - ref_bf16))))
    # ...and against the full-f32 PyTorch-equivalent forward (semantic check, looser).
    ref_f32 = _reference_mean(obs, weights, biases)
    assert jnp.allclose(batch_mean, ref_f32, rtol=3e-2, atol=3e-2), (
        float(jnp.max(jnp.abs(batch_mean - ref_f32))))
    assert jnp.allclose(scale_tril, jnp.eye(ac_dim, dtype=jnp.float32)), "exp(0) diag expected"

    print("KERNEL_OK")
</pallas_src>

<mosaic_0001>
module attributes {stable_mosaic.version = 11 : i64} {
  func.func @_fused_mlp_kernel(%arg0: i32, %arg1: memref<16x4xf32, #tpu.memory_space<vmem>>, %arg2: memref<4x128xbf16, #tpu.memory_space<vmem>>, %arg3: memref<1x128xf32, #tpu.memory_space<vmem>>, %arg4: memref<128x128xbf16, #tpu.memory_space<vmem>>, %arg5: memref<1x128xf32, #tpu.memory_space<vmem>>, %arg6: memref<128x2xbf16, #tpu.memory_space<vmem>>, %arg7: memref<1x2xf32, #tpu.memory_space<vmem>>, %arg8: memref<16x2xf32, #tpu.memory_space<vmem>>) attributes {dimension_semantics = [#tpu.dimension_semantics<parallel>], iteration_bounds = array<i64: 1>, scalar_prefetch = 0 : i64, scratch_operands = 0 : i64, tpu.core_type = #tpu.core_type<tc>, window_params = [{transform_indices = @transform_0, window_bounds = array<i64: 16, 4>}, {pipeline_mode = #tpu.pipeline_mode<synchronous>, transform_indices = @transform_1, window_bounds = array<i64: 4, 128>}, {pipeline_mode = #tpu.pipeline_mode<synchronous>, transform_indices = @transform_2, window_bounds = array<i64: 1, 128>}, {pipeline_mode = #tpu.pipeline_mode<synchronous>, transform_indices = @transform_3, window_bounds = array<i64: 128, 128>}, {pipeline_mode = #tpu.pipeline_mode<synchronous>, transform_indices = @transform_4, window_bounds = array<i64: 1, 128>}, {pipeline_mode = #tpu.pipeline_mode<synchronous>, transform_indices = @transform_5, window_bounds = array<i64: 128, 2>}, {pipeline_mode = #tpu.pipeline_mode<synchronous>, transform_indices = @transform_6, window_bounds = array<i64: 1, 2>}, {transform_indices = @transform_7, window_bounds = array<i64: 16, 2>}]} {
    %c0 = arith.constant 0 : index
    %c0_0 = arith.constant 0 : index
    %0 = vector.load %arg1[%c0, %c0_0] : memref<16x4xf32, #tpu.memory_space<vmem>>, vector<16x4xf32>
    %1 = arith.truncf %0 : vector<16x4xf32> to vector<16x4xbf16>
    %c0_1 = arith.constant 0 : index
    %c0_2 = arith.constant 0 : index
    %2 = vector.load %arg2[%c0_1, %c0_2] : memref<4x128xbf16, #tpu.memory_space<vmem>>, vector<4x128xbf16>
    %c0_3 = arith.constant 0 : index
    %c0_4 = arith.constant 0 : index
    %3 = vector.load %arg3[%c0_3, %c0_4] : memref<1x128xf32, #tpu.memory_space<vmem>>, vector<1x128xf32>
    %cst = arith.constant dense<0.000000e+00> : vector<16x128xf32>
    %4 = tpu.matmul %1, %2, %cst {dimension_numbers = #tpu.dot_dimension_numbers<[1], [0], [0], [1], [0, 0, 1, 1], [], []>} : vector<16x4xbf16>, vector<4x128xbf16>, vector<16x128xf32> -> vector<16x128xf32>
    %5 = vector.broadcast %3 : vector<1x128xf32> to vector<16x128xf32>
    %6 = arith.addf %4, %5 : vector<16x128xf32>
    %7 = math.tanh %6 : vector<16x128xf32>
    %8 = arith.truncf %7 : vector<16x128xf32> to vector<16x128xbf16>
    %c0_5 = arith.constant 0 : index
    %c0_6 = arith.constant 0 : index
    %9 = vector.load %arg4[%c0_5, %c0_6] : memref<128x128xbf16, #tpu.memory_space<vmem>>, vector<128x128xbf16>
    %c0_7 = arith.constant 0 : index
    %c0_8 = arith.constant 0 : index
    %10 = vector.load %arg5[%c0_7, %c0_8] : memref<1x128xf32, #tpu.memory_space<vmem>>, vector<1x128xf32>
    %cst_9 = arith.constant dense<0.000000e+00> : vector<16x128xf32>
    %11 = tpu.matmul %8, %9, %cst_9 {dimension_numbers = #tpu.dot_dimension_numbers<[1], [0], [0], [1], [0, 0, 1, 1], [], []>} : vector<16x128xbf16>, vector<128x128xbf16>, vector<16x128xf32> -> vector<16x128xf32>
    %12 = vector.broadcast %10 : vector<1x128xf32> to vector<16x128xf32>
    %13 = arith.addf %11, %12 : vector<16x128xf32>
    %14 = math.tanh %13 : vector<16x128xf32>
    %15 = arith.truncf %14 : vector<16x128xf32> to vector<16x128xbf16>
    %c0_10 = arith.constant 0 : index
    %c0_11 = arith.constant 0 : index
    %16 = vector.load %arg6[%c0_10, %c0_11] : memref<128x2xbf16, #tpu.memory_space<vmem>>, vector<128x2xbf16>
    %c0_12 = arith.constant 0 : index
    %c0_13 = arith.constant 0 : index
    %17 = vector.load %arg7[%c0_12, %c0_13] : memref<1x2xf32, #tpu.memory_space<vmem>>, vector<1x2xf32>
    %cst_14 = arith.constant dense<0.000000e+00> : vector<16x2xf32>
    %18 = tpu.matmul %15, %16, %cst_14 {dimension_numbers = #tpu.dot_dimension_numbers<[1], [0], [0], [1], [0, 0, 1, 1], [], []>} : vector<16x128xbf16>, vector<128x2xbf16>, vector<16x2xf32> -> vector<16x2xf32>
    %19 = vector.broadcast %17 : vector<1x2xf32> to vector<16x2xf32>
    %20 = arith.addf %18, %19 : vector<16x2xf32>
    %c0_15 = arith.constant 0 : index
    %c0_16 = arith.constant 0 : index
    %21 = vector.load %arg8[%c0_15, %c0_16] : memref<16x2xf32, #tpu.memory_space<vmem>>, vector<16x2xf32>
    tpu.vector_store %arg8[%c0_15, %c0_16], %20 {strides = array<i32>} : memref<16x2xf32, #tpu.memory_space<vmem>>, vector<16x2xf32>,
    return
  }
  func.func @transform_0(%arg0: i32) -> (i32, i32) {
    %c0_i32 = arith.constant 0 : i32
    %c0_i32_0 = arith.constant 0 : i32
    return %arg0, %c0_i32 : i32, i32
  }
  func.func @transform_1(%arg0: i32) -> (i32, i32) {
    %c0_i32 = arith.constant 0 : i32
    %c0_i32_0 = arith.constant 0 : i32
    %c0_i32_1 = arith.constant 0 : i32
    return %c0_i32, %c0_i32_0 : i32, i32
  }
  func.func @transform_2(%arg0: i32) -> (i32, i32) {
    %c0_i32 = arith.constant 0 : i32
    %c0_i32_0 = arith.constant 0 : i32
    %c0_i32_1 = arith.constant 0 : i32
    return %c0_i32, %c0_i32_0 : i32, i32
  }
  func.func @transform_3(%arg0: i32) -> (i32, i32) {
    %c0_i32 = arith.constant 0 : i32
    %c0_i32_0 = arith.constant 0 : i32
    %c0_i32_1 = arith.constant 0 : i32
    return %c0_i32, %c0_i32_0 : i32, i32
  }
  func.func @transform_4(%arg0: i32) -> (i32, i32) {
    %c0_i32 = arith.constant 0 : i32
    %c0_i32_0 = arith.constant 0 : i32
    %c0_i32_1 = arith.constant 0 : i32
    return %c0_i32, %c0_i32_0 : i32, i32
  }
  func.func @transform_5(%arg0: i32) -> (i32, i32) {
    %c0_i32 = arith.constant 0 : i32
    %c0_i32_0 = arith.constant 0 : i32
    %c0_i32_1 = arith.constant 0 : i32
    return %c0_i32, %c0_i32_0 : i32, i32
  }
  func.func @transform_6(%arg0: i32) -> (i32, i32) {
    %c0_i32 = arith.constant 0 : i32
    %c0_i32_0 = arith.constant 0 : i32
    %c0_i32_1 = arith.constant 0 : i32
    return %c0_i32, %c0_i32_0 : i32, i32
  }
  func.func @transform_7(%arg0: i32) -> (i32, i32) {
    %c0_i32 = arith.constant 0 : i32
    %c0_i32_0 = arith.constant 0 : i32
    return %arg0, %c0_i32 : i32, i32
  }
}

module attributes {stable_mosaic.version = 11 : i64} {
  func.func @_fused_mlp_kernel(%arg0: i32, %arg1: memref<16x4xf32, #tpu.memory_space<vmem>>, %arg2: memref<4x128xbf16, #tpu.memory_space<vmem>>, %arg3: memref<1x128xf32, #tpu.memory_space<vmem>>, %arg4: memref<128x128xbf16, #tpu.memory_space<vmem>>, %arg5: memref<1x128xf32, #tpu.memory_space<vmem>>, %arg6: memref<128x2xbf16, #tpu.memory_space<vmem>>, %arg7: memref<1x2xf32, #tpu.memory_space<vmem>>, %arg8: memref<16x2xf32, #tpu.memory_space<vmem>>) attributes {dimension_semantics = [#tpu.dimension_semantics<parallel>], iteration_bounds = array<i64: 1>, scalar_prefetch = 0 : i64, scratch_operands = 0 : i64, tpu.core_type = #tpu.core_type<tc>, window_params = [{transform_indices = @transform_0, window_bounds = array<i64: 16, 4>}, {pipeline_mode = #tpu.pipeline_mode<synchronous>, transform_indices = @transform_1, window_bounds = array<i64: 4, 128>}, {pipeline_mode = #tpu.pipeline_mode<synchronous>, transform_indices = @transform_2, window_bounds = array<i64: 1, 128>}, {pipeline_mode = #tpu.pipeline_mode<synchronous>, transform_indices = @transform_3, window_bounds = array<i64: 128, 128>}, {pipeline_mode = #tpu.pipeline_mode<synchronous>, transform_indices = @transform_4, window_bounds = array<i64: 1, 128>}, {pipeline_mode = #tpu.pipeline_mode<synchronous>, transform_indices = @transform_5, window_bounds = array<i64: 128, 2>}, {pipeline_mode = #tpu.pipeline_mode<synchronous>, transform_indices = @transform_6, window_bounds = array<i64: 1, 2>}, {transform_indices = @transform_7, window_bounds = array<i64: 16, 2>}]} {
    %c0 = arith.constant 0 : index
    %c0_0 = arith.constant 0 : index
    %0 = vector.load %arg1[%c0, %c0_0] : memref<16x4xf32, #tpu.memory_space<vmem>>, vector<16x4xf32>
    %1 = arith.truncf %0 : vector<16x4xf32> to vector<16x4xbf16>
    %c0_1 = arith.constant 0 : index
    %c0_2 = arith.constant 0 : index
    %2 = vector.load %arg2[%c0_1, %c0_2] : memref<4x128xbf16, #tpu.memory_space<vmem>>, vector<4x128xbf16>
    %c0_3 = arith.constant 0 : index
    %c0_4 = arith.constant 0 : index
    %3 = vector.load %arg3[%c0_3, %c0_4] : memref<1x128xf32, #tpu.memory_space<vmem>>, vector<1x128xf32>
    %cst = arith.constant dense<0.000000e+00> : vector<16x128xf32>
    %4 = tpu.matmul %1, %2, %cst {dimension_numbers = #tpu.dot_dimension_numbers<[1], [0], [0], [1], [0, 0, 1, 1], [], []>} : vector<16x4xbf16>, vector<4x128xbf16>, vector<16x128xf32> -> vector<16x128xf32>
    %5 = vector.broadcast %3 : vector<1x128xf32> to vector<16x128xf32>
    %6 = arith.addf %4, %5 : vector<16x128xf32>
    %7 = math.tanh %6 : vector<16x128xf32>
    %8 = arith.truncf %7 : vector<16x128xf32> to vector<16x128xbf16>
    %c0_5 = arith.constant 0 : index
    %c0_6 = arith.constant 0 : index
    %9 = vector.load %arg4[%c0_5, %c0_6] : memref<128x128xbf16, #tpu.memory_space<vmem>>, vector<128x128xbf16>
    %c0_7 = arith.constant 0 : index
    %c0_8 = arith.constant 0 : index
    %10 = vector.load %arg5[%c0_7, %c0_8] : memref<1x128xf32, #tpu.memory_space<vmem>>, vector<1x128xf32>
    %cst_9 = arith.constant dense<0.000000e+00> : vector<16x128xf32>
    %11 = tpu.matmul %8, %9, %cst_9 {dimension_numbers = #tpu.dot_dimension_numbers<[1], [0], [0], [1], [0, 0, 1, 1], [], []>} : vector<16x128xbf16>, vector<128x128xbf16>, vector<16x128xf32> -> vector<16x128xf32>
    %12 = vector.broadcast %10 : vector<1x128xf32> to vector<16x128xf32>
    %13 = arith.addf %11, %12 : vector<16x128xf32>
    %14 = math.tanh %13 : vector<16x128xf32>
    %15 = arith.truncf %14 : vector<16x128xf32> to vector<16x128xbf16>
    %c0_10 = arith.constant 0 : index
    %c0_11 = arith.constant 0 : index
    %16 = vector.load %arg6[%c0_10, %c0_11] : memref<128x2xbf16, #tpu.memory_space<vmem>>, vector<128x2xbf16>
    %c0_12 = arith.constant 0 : index
    %c0_13 = arith.constant 0 : index
    %17 = vector.load %arg7[%c0_12, %c0_13] : memref<1x2xf32, #tpu.memory_space<vmem>>, vector<1x2xf32>
    %cst_14 = arith.constant dense<0.000000e+00> : vector<16x2xf32>
    %18 = tpu.matmul %15, %16, %cst_14 {dimension_numbers = #tpu.dot_dimension_numbers<[1], [0], [0], [1], [0, 0, 1, 1], [], []>} : vector<16x128xbf16>, vector<128x2xbf16>, vector<16x2xf32> -> vector<16x2xf32>
    %19 = vector.broadcast %17 : vector<1x2xf32> to vector<16x2xf32>
    %20 = arith.addf %18, %19 : vector<16x2xf32>
    %c0_15 = arith.constant 0 : index
    %c0_16 = arith.constant 0 : index
    %21 = vector.load %arg8[%c0_15, %c0_16] : memref<16x2xf32, #tpu.memory_space<vmem>>, vector<16x2xf32>
    tpu.vector_store %arg8[%c0_15, %c0_16], %20 {strides = array<i32>} : memref<16x2xf32, #tpu.memory_space<vmem>>, vector<16x2xf32>,
    return
  }
  func.func @transform_0(%arg0: i32) -> (i32, i32) {
    %c0_i32 = arith.constant 0 : i32
    %c0_i32_0 = arith.constant 0 : i32
    return %arg0, %c0_i32 : i32, i32
  }
  func.func @transform_1(%arg0: i32) -> (i32, i32) {
    %c0_i32 = arith.constant 0 : i32
    %c0_i32_0 = arith.constant 0 : i32
    %c0_i32_1 = arith.constant 0 : i32
    return %c0_i32, %c0_i32_0 : i32, i32
  }
  func.func @transform_2(%arg0: i32) -> (i32, i32) {
    %c0_i32 = arith.constant 0 : i32
    %c0_i32_0 = arith.constant 0 : i32
    %c0_i32_1 = arith.constant 0 : i32
    return %c0_i32, %c0_i32_0 : i32, i32
  }
  func.func @transform_3(%arg0: i32) -> (i32, i32) {
    %c0_i32 = arith.constant 0 : i32
    %c0_i32_0 = arith.constant 0 : i32
    %c0_i32_1 = arith.constant 0 : i32
    return %c0_i32, %c0_i32_0 : i32, i32
  }
  func.func @transform_4(%arg0: i32) -> (i32, i32) {
    %c0_i32 = arith.constant 0 : i32
    %c0_i32_0 = arith.constant 0 : i32
    %c0_i32_1 = arith.constant 0 : i32
    return %c0_i32, %c0_i32_0 : i32, i32
  }
  func.func @transform_5(%arg0: i32) -> (i32, i32) {
    %c0_i32 = arith.constant 0 : i32
    %c0_i32_0 = arith.constant 0 : i32
    %c0_i32_1 = arith.constant 0 : i32
    return %c0_i32, %c0_i32_0 : i32, i32
  }
  func.func @transform_6(%arg0: i32) -> (i32, i32) {
    %c0_i32 = arith.constant 0 : i32
    %c0_i32_0 = arith.constant 0 : i32
    %c0_i32_1 = arith.constant 0 : i32
    return %c0_i32, %c0_i32_0 : i32, i32
  }
  func.func @transform_7(%arg0: i32) -> (i32, i32) {
    %c0_i32 = arith.constant 0 : i32
    %c0_i32_0 = arith.constant 0 : i32
    return %arg0, %c0_i32 : i32, i32
  }
}

</mosaic_0001>

<llo_original>
// kernel: tpu_custom_call.1
$region0: #{tpu_custom_call.1}
  #allocation0 [shape = 'u32[]', space=smem, size = 0x4, offset = 0x4, fixed_abs, tag = 'smem constant byte address 0x4 - core index']
  #allocation1 [shape = 'u32[72,128]{1,0:T(1,128)}', space=vmem, size = 0x9000, scoped, tag = 'internal scratch']
  %s0 = inlined_call_operand.vmem [shape: f32[16,4], index: 0, kind: input, shape index: {}]
  %s1 = inlined_call_operand.vmem [shape: bf16[4,128], index: 1, kind: input, shape index: {}]
  %s2 = inlined_call_operand.vmem [shape: f32[1,128], index: 2, kind: input, shape index: {}]
  %s3 = inlined_call_operand.vmem [shape: bf16[128,128], index: 3, kind: input, shape index: {}]
  %s4 = inlined_call_operand.vmem [shape: f32[1,128], index: 4, kind: input, shape index: {}]
  %s5 = inlined_call_operand.vmem [shape: bf16[128,2], index: 5, kind: input, shape index: {}]
  %s6 = inlined_call_operand.vmem [shape: f32[1,2], index: 6, kind: input, shape index: {}]
  %s7 = inlined_call_operand.vmem [shape: f32[16,2], index: 7, kind: output, shape index: {}]
  %s8 = sld [smem:[#allocation0]]
  $region38: #{tpu_custom_call.1} parent=0
    _
  %s10 = ssub.s32 1, %s8
  %s11 = scalar_select 0, %s10, %s8
  // Predicated region
  $region2: #{tpu_custom_call.1} parent=0 // pred_check
    _
  $region3: #{tpu_custom_call.1} parent=0 // pred_check_branch
    %13 = sbr.rel (0) target = $region5
  $region4: #{tpu_custom_call.1} parent=0 // pred_region
    _
  $region5: #{tpu_custom_call.1} parent=0 // pred_fallthru
    _
  // Predicated region
  $region6: #{tpu_custom_call.1} parent=0 // pred_check
    _
  $region7: #{tpu_custom_call.1} parent=0 // pred_check_branch
    %15 = sbr.rel (0) target = $region9
  $region8: #{tpu_custom_call.1} parent=0 // pred_region
    _
  $region9: #{tpu_custom_call.1} parent=0 // pred_fallthru
    _
  // Predicated region
  $region10: #{tpu_custom_call.1} parent=0 // pred_check
    _
  $region11: #{tpu_custom_call.1} parent=0 // pred_check_branch
    %17 = sbr.rel (0) target = $region13
  $region12: #{tpu_custom_call.1} parent=0 // pred_region
    _
  $region13: #{tpu_custom_call.1} parent=0 // pred_fallthru
    _
  // Predicated region
  $region14: #{tpu_custom_call.1} parent=0 // pred_check
    _
  $region15: #{tpu_custom_call.1} parent=0 // pred_check_branch
    %19 = sbr.rel (0) target = $region17
  $region16: #{tpu_custom_call.1} parent=0 // pred_region
    _
  $region17: #{tpu_custom_call.1} parent=0 // pred_fallthru
    _
  // Predicated region
  $region18: #{tpu_custom_call.1} parent=0 // pred_check
    _
  $region19: #{tpu_custom_call.1} parent=0 // pred_check_branch
    %21 = sbr.rel (0) target = $region21
  $region20: #{tpu_custom_call.1} parent=0 // pred_region
    _
  $region21: #{tpu_custom_call.1} parent=0 // pred_fallthru
    _
  // Predicated region
  $region22: #{tpu_custom_call.1} parent=0 // pred_check
    _
  $region23: #{tpu_custom_call.1} parent=0 // pred_check_branch
    %23 = sbr.rel (0) target = $region25
  $region24: #{tpu_custom_call.1} parent=0 // pred_region
    _
  $region25: #{tpu_custom_call.1} parent=0 // pred_fallthru
    _
  // Predicated region
  $region26: #{tpu_custom_call.1} parent=0 // pred_check
    _
  $region27: #{tpu_custom_call.1} parent=0 // pred_check_branch
    %25 = sbr.rel (0) target = $region29
  $region28: #{tpu_custom_call.1} parent=0 // pred_region
    _
  $region29: #{tpu_custom_call.1} parent=0 // pred_fallthru
    _
  %v27 = vld [vmem:[%s0] sm:$0xff]
  %v28 = vld [vmem:[%s0 + $0x8] sm:$0xff]
  %v29 = vpack.c.bf16 %v28, %v27
  %v30 = vld [vmem:[%s1] sm:$0x3]
  %v31 = vld [vmem:[%s2] sm:$0x1]
  %v33 = vperm.slane %v31, 0
  %vm35 = vcmask 31744
  %v37 = vsel %vm35, %v29, 0
  %vm39 = vcmask 1041408
  %v41 = vsel %vm39, %v30, 0
  %43 = vmatpush.bf16.msra.mxu0 0
  %44 = vmatpush.bf16.msra.mxu0 0
  %45 = vmatpush.bf16.msra.mxu0 0
  %46 = vmatpush.bf16.msra.mxu0 0
  %47 = vmatpush.bf16.msra.mxu0 0
  %48 = vmatpush.bf16.msra.mxu0 0
  %49 = vmatpush.bf16.msra.mxu0 0
  %50 = vmatpush.bf16.msra.mxu0 %v41
  %51 = vmatmul.bf16.gmra.mxu0 %v37
  %v52 = vpop.f32.mrf.mxu0
  %v53 = vadd.f32 %v33, %v52
  %v54 = vpop.f32.mrf.mxu0
  %v55 = vadd.f32 %v33, %v54
  %56 = vdwg.mxu0
  %v57 = vtanh.pop %v53
  %v58 = vtanh.pop %v55
  %v59 = vpack.c.bf16 %v58, %v57
  %v60 = vld [vmem:[%s3] sm:$0xf]
  %v61 = vld [vmem:[%s3 + $0x4] sm:$0xf]
  %v62 = vld [vmem:[%s3 + $0x8] sm:$0xf]
  %v63 = vld [vmem:[%s3 + $0xc] sm:$0xf]
  %v64 = vld [vmem:[%s3 + $0x10] sm:$0xf]
  %v65 = vld [vmem:[%s3 + $0x14] sm:$0xf]
  %v66 = vld [vmem:[%s3 + $0x18] sm:$0xf]
  %v67 = vld [vmem:[%s3 + $0x1c] sm:$0xf]
  %v68 = vld [vmem:[%s3 + $0x20] sm:$0xf]
  %v69 = vld [vmem:[%s3 + $0x24] sm:$0xf]
  %v70 = vld [vmem:[%s3 + $0x28] sm:$0xf]
  %v71 = vld [vmem:[%s3 + $0x2c] sm:$0xf]
  %v72 = vld [vmem:[%s3 + $0x30] sm:$0xf]
  %v73 = vld [vmem:[%s3 + $0x34] sm:$0xf]
  %v74 = vld [vmem:[%s3 + $0x38] sm:$0xf]
  %v75 = vld [vmem:[%s3 + $0x3c] sm:$0xf]
  %v76 = vld [vmem:[%s4] sm:$0x1]
  %v78 = vperm.slane %v76, 0
  %v96 = vunpack.c.l.b16 %v60
  %v97 = vunpack.c.l.b16 %v61
  %v98 = vunpack.c.l.b16 %v62
  %v99 = vunpack.c.l.b16 %v63
  %v100 = vunpack.c.l.b16 %v64
  %v101 = vunpack.c.l.b16 %v65
  %v102 = vunpack.c.l.b16 %v66
  %v103 = vunpack.c.l.b16 %v67
  %v104 = vunpack.c.l.b16 %v68
  %v105 = vunpack.c.l.b16 %v69
  %v106 = vunpack.c.l.b16 %v70
  %v107 = vunpack.c.l.b16 %v71
  %v108 = vunpack.c.l.b16 %v72
  %v109 = vunpack.c.l.b16 %v73
  %v110 = vunpack.c.l.b16 %v74
  %v111 = vunpack.c.l.b16 %v75
  %v112 = vpack.c.b16 %v97, %v96
  %v113 = vpack.c.b16 %v99, %v98
  %v114 = vpack.c.b16 %v101, %v100
  %v115 = vpack.c.b16 %v103, %v102
  %v116 = vpack.c.b16 %v105, %v104
  %v117 = vpack.c.b16 %v107, %v106
  %v118 = vpack.c.b16 %v109, %v108
  %v119 = vpack.c.b16 %v111, %v110
  %128 = vmatpush.bf16.msra.mxu0 %v119
  %129 = vmatpush.bf16.msra.mxu0 %v118
  %130 = vmatpush.bf16.msra.mxu0 %v117
  %131 = vmatpush.bf16.msra.mxu0 %v116
  %132 = vmatpush.bf16.msra.mxu0 %v115
  %133 = vmatpush.bf16.msra.mxu0 %v114
  %134 = vmatpush.bf16.msra.mxu0 %v113
  %135 = vmatpush.bf16.msra.mxu0 %v112
  %136 = vmatmul.bf16.gmra.mxu0 %v59
  %v137 = vpop.f32.mrf.mxu0
  %v138 = vadd.f32 %v78, %v137
  %v139 = vpop.f32.mrf.mxu0
  %v140 = vadd.f32 %v78, %v139
  %141 = vdwg.mxu0
  %v142 = vtanh.pop %v138
  %v143 = vtanh.pop %v140
  %v144 = vpack.c.bf16 %v143, %v142
  %v145 = vld [vmem:[%s5] sm:$0xf]
  %v146 = vld [vmem:[%s5 + $0x4] sm:$0xf]
  %v147 = vld [vmem:[%s5 + $0x8] sm:$0xf]
  %v148 = vld [vmem:[%s5 + $0xc] sm:$0xf]
  %v149 = vld [vmem:[%s5 + $0x10] sm:$0xf]
  %v150 = vld [vmem:[%s5 + $0x14] sm:$0xf]
  %v151 = vld [vmem:[%s5 + $0x18] sm:$0xf]
  %v152 = vld [vmem:[%s5 + $0x1c] sm:$0xf]
  %v153 = vld [vmem:[%s5 + $0x20] sm:$0xf]
  %v154 = vld [vmem:[%s5 + $0x24] sm:$0xf]
  %v155 = vld [vmem:[%s5 + $0x28] sm:$0xf]
  %v156 = vld [vmem:[%s5 + $0x2c] sm:$0xf]
  %v157 = vld [vmem:[%s5 + $0x30] sm:$0xf]
  %v158 = vld [vmem:[%s5 + $0x34] sm:$0xf]
  %v159 = vld [vmem:[%s5 + $0x38] sm:$0xf]
  %v160 = vld [vmem:[%s5 + $0x3c] sm:$0xf]
  %v161 = vld [vmem:[%s6] sm:$0x1]
  %v163 = vperm.slane %v161, 0
  %v181 = vunpack.c.l.b16 %v145
  %v182 = vunpack.c.l.b16 %v146
  %v183 = vunpack.c.l.b16 %v147
  %v184 = vunpack.c.l.b16 %v148
  %v185 = vunpack.c.l.b16 %v149
  %v186 = vunpack.c.l.b16 %v150
  %v187 = vunpack.c.l.b16 %v151
  %v188 = vunpack.c.l.b16 %v152
  %v189 = vunpack.c.l.b16 %v153
  %v190 = vunpack.c.l.b16 %v154
  %v191 = vunpack.c.l.b16 %v155
  %v192 = vunpack.c.l.b16 %v156
  %v193 = vunpack.c.l.b16 %v157
  %v194 = vunpack.c.l.b16 %v158
  %v195 = vunpack.c.l.b16 %v159
  %v196 = vunpack.c.l.b16 %v160
  %v197 = vpack.c.b16 %v182, %v181
  %v198 = vpack.c.b16 %v184, %v183
  %v199 = vpack.c.b16 %v186, %v185
  %v200 = vpack.c.b16 %v188, %v187
  %v201 = vpack.c.b16 %v190, %v189
  %v202 = vpack.c.b16 %v192, %v191
  %v203 = vpack.c.b16 %v194, %v193
  %v204 = vpack.c.b16 %v196, %v195
  %213 = vmatpush.bf16.msra.mxu0 %v204
  %214 = vmatpush.bf16.msra.mxu0 %v203
  %215 = vmatpush.bf16.msra.mxu0 %v202
  %216 = vmatpush.bf16.msra.mxu0 %v201
  %217 = vmatpush.bf16.msra.mxu0 %v200
  %218 = vmatpush.bf16.msra.mxu0 %v199
  %219 = vmatpush.bf16.msra.mxu0 %v198
  %220 = vmatpush.bf16.msra.mxu0 %v197
  %221 = vmatmul.bf16.gmra.mxu0 %v144
  %v222 = vpop.f32.mrf.mxu0
  %v223 = vadd.f32 %v163, %v222
  %v224 = vpop.f32.mrf.mxu0
  %v225 = vadd.f32 %v163, %v224
  %226 = vdwg.mxu0
  %vm227 = vcmask 15360
  %228 = vst.msk [vmem:[%s7] sm:$0xff] %vm227, %v223
  %229 = vst.msk [vmem:[%s7 + $0x8] sm:$0xff] %vm227, %v225
  // Predicated region
  $region30: #{tpu_custom_call.1} parent=0 // pred_check
    _
  $region31: #{tpu_custom_call.1} parent=0 // pred_check_branch
    %231 = sbr.rel (0) target = $region33
  $region32: #{tpu_custom_call.1} parent=0 // pred_region
    _
  $region33: #{tpu_custom_call.1} parent=0 // pred_fallthru
    _
  // Predicated region
  $region34: #{tpu_custom_call.1} parent=0 // pred_check
    _
  $region35: #{tpu_custom_call.1} parent=0 // pred_check_branch
    %233 = sbr.rel (0) target = $region37
  $region36: #{tpu_custom_call.1} parent=0 // pred_region
    _
  $region37: #{tpu_custom_call.1} parent=0 // pred_fallthru
    _

// kernel: tpu_custom_call.1
$region0: #{tpu_custom_call.1}
  #allocation0 [shape = 'u32[]', space=smem, size = 0x4, offset = 0x4, fixed_abs, tag = 'smem constant byte address 0x4 - core index']
  #allocation1 [shape = 'u32[72,128]{1,0:T(1,128)}', space=vmem, size = 0x9000, scoped, tag = 'internal scratch']
  %s0 = inlined_call_operand.vmem [shape: f32[16,4], index: 0, kind: input, shape index: {}]
  %s1 = inlined_call_operand.vmem [shape: bf16[4,128], index: 1, kind: input, shape index: {}]
  %s2 = inlined_call_operand.vmem [shape: f32[1,128], index: 2, kind: input, shape index: {}]
  %s3 = inlined_call_operand.vmem [shape: bf16[128,128], index: 3, kind: input, shape index: {}]
  %s4 = inlined_call_operand.vmem [shape: f32[1,128], index: 4, kind: input, shape index: {}]
  %s5 = inlined_call_operand.vmem [shape: bf16[128,2], index: 5, kind: input, shape index: {}]
  %s6 = inlined_call_operand.vmem [shape: f32[1,2], index: 6, kind: input, shape index: {}]
  %s7 = inlined_call_operand.vmem [shape: f32[16,2], index: 7, kind: output, shape index: {}]
  %s8 = sld [smem:[#allocation0]]
  $region38: #{tpu_custom_call.1} parent=0
    _
  %s10 = ssub.s32 1, %s8
  %s11 = scalar_select 0, %s10, %s8
  // Predicated region
  $region2: #{tpu_custom_call.1} parent=0 // pred_check
    _
  $region3: #{tpu_custom_call.1} parent=0 // pred_check_branch
    %13 = sbr.rel (0) target = $region5
  $region4: #{tpu_custom_call.1} parent=0 // pred_region
    _
  $region5: #{tpu_custom_call.1} parent=0 // pred_fallthru
    _
  // Predicated region
  $region6: #{tpu_custom_call.1} parent=0 // pred_check
    _
  $region7: #{tpu_custom_call.1} parent=0 // pred_check_branch
    %15 = sbr.rel (0) target = $region9
  $region8: #{tpu_custom_call.1} parent=0 // pred_region
    _
  $region9: #{tpu_custom_call.1} parent=0 // pred_fallthru
    _
  // Predicated region
  $region10: #{tpu_custom_call.1} parent=0 // pred_check
    _
  $region11: #{tpu_custom_call.1} parent=0 // pred_check_branch
    %17 = sbr.rel (0) target = $region13
  $region12: #{tpu_custom_call.1} parent=0 // pred_region
    _
  $region13: #{tpu_custom_call.1} parent=0 // pred_fallthru
    _
  // Predicated region
  $region14: #{tpu_custom_call.1} parent=0 // pred_check
    _
  $region15: #{tpu_custom_call.1} parent=0 // pred_check_branch
    %19 = sbr.rel (0) target = $region17
  $region16: #{tpu_custom_call.1} parent=0 // pred_region
    _
  $region17: #{tpu_custom_call.1} parent=0 // pred_fallthru
    _
  // Predicated region
  $region18: #{tpu_custom_call.1} parent=0 // pred_check
    _
  $region19: #{tpu_custom_call.1} parent=0 // pred_check_branch
    %21 = sbr.rel (0) target = $region21
  $region20: #{tpu_custom_call.1} parent=0 // pred_region
    _
  $region21: #{tpu_custom_call.1} parent=0 // pred_fallthru
    _
  // Predicated region
  $region22: #{tpu_custom_call.1} parent=0 // pred_check
    _
  $region23: #{tpu_custom_call.1} parent=0 // pred_check_branch
    %23 = sbr.rel (0) target = $region25
  $region24: #{tpu_custom_call.1} parent=0 // pred_region
    _
  $region25: #{tpu_custom_call.1} parent=0 // pred_fallthru
    _
  // Predicated region
  $region26: #{tpu_custom_call.1} parent=0 // pred_check
    _
  $region27: #{tpu_custom_call.1} parent=0 // pred_check_branch
    %25 = sbr.rel (0) target = $region29
  $region28: #{tpu_custom_call.1} parent=0 // pred_region
    _
  $region29: #{tpu_custom_call.1} parent=0 // pred_fallthru
    _
  %v27 = vld [vmem:[%s0] sm:$0xff]
  %v28 = vld [vmem:[%s0 + $0x8] sm:$0xff]
  %v29 = vpack.c.bf16 %v28, %v27
  %v30 = vld [vmem:[%s1] sm:$0x3]
  %v31 = vld [vmem:[%s2] sm:$0x1]
  %v33 = vperm.slane %v31, 0
  %vm35 = vcmask 31744
  %v37 = vsel %vm35, %v29, 0
  %vm39 = vcmask 1041408
  %v41 = vsel %vm39, %v30, 0
  %43 = vmatpush.bf16.msra.mxu0 0
  %44 = vmatpush.bf16.msra.mxu0 0
  %45 = vmatpush.bf16.msra.mxu0 0
  %46 = vmatpush.bf16.msra.mxu0 0
  %47 = vmatpush.bf16.msra.mxu0 0
  %48 = vmatpush.bf16.msra.mxu0 0
  %49 = vmatpush.bf16.msra.mxu0 0
  %50 = vmatpush.bf16.msra.mxu0 %v41
  %51 = vmatmul.bf16.gmra.mxu0 %v37
  %v52 = vpop.f32.mrf.mxu0
  %v53 = vadd.f32 %v33, %v52
  %v54 = vpop.f32.mrf.mxu0
  %v55 = vadd.f32 %v33, %v54
  %56 = vdwg.mxu0
  %v57 = vtanh.pop %v53
  %v58 = vtanh.pop %v55
  %v59 = vpack.c.bf16 %v58, %v57
  %v60 = vld [vmem:[%s3] sm:$0xf]
  %v61 = vld [vmem:[%s3 + $0x4] sm:$0xf]
  %v62 = vld [vmem:[%s3 + $0x8] sm:$0xf]
  %v63 = vld [vmem:[%s3 + $0xc] sm:$0xf]
  %v64 = vld [vmem:[%s3 + $0x10] sm:$0xf]
  %v65 = vld [vmem:[%s3 + $0x14] sm:$0xf]
  %v66 = vld [vmem:[%s3 + $0x18] sm:$0xf]
  %v67 = vld [vmem:[%s3 + $0x1c] sm:$0xf]
  %v68 = vld [vmem:[%s3 + $0x20] sm:$0xf]
  %v69 = vld [vmem:[%s3 + $0x24] sm:$0xf]
  %v70 = vld [vmem:[%s3 + $0x28] sm:$0xf]
  %v71 = vld [vmem:[%s3 + $0x2c] sm:$0xf]
  %v72 = vld [vmem:[%s3 + $0x30] sm:$0xf]
  %v73 = vld [vmem:[%s3 + $0x34] sm:$0xf]
  %v74 = vld [vmem:[%s3 + $0x38] sm:$0xf]
  %v75 = vld [vmem:[%s3 + $0x3c] sm:$0xf]
  %v76 = vld [vmem:[%s4] sm:$0x1]
  %v78 = vperm.slane %v76, 0
  %v96 = vunpack.c.l.b16 %v60
  %v97 = vunpack.c.l.b16 %v61
  %v98 = vunpack.c.l.b16 %v62
  %v99 = vunpack.c.l.b16 %v63
  %v100 = vunpack.c.l.b16 %v64
  %v101 = vunpack.c.l.b16 %v65
  %v102 = vunpack.c.l.b16 %v66
  %v103 = vunpack.c.l.b16 %v67
  %v104 = vunpack.c.l.b16 %v68
  %v105 = vunpack.c.l.b16 %v69
  %v106 = vunpack.c.l.b16 %v70
  %v107 = vunpack.c.l.b16 %v71
  %v108 = vunpack.c.l.b16 %v72
  %v109 = vunpack.c.l.b16 %v73
  %v110 = vunpack.c.l.b16 %v74
  %v111 = vunpack.c.l.b16 %v75
  %v112 = vpack.c.b16 %v97, %v96
  %v113 = vpack.c.b16 %v99, %v98
  %v114 = vpack.c.b16 %v101, %v100
  %v115 = vpack.c.b16 %v103, %v102
  %v116 = vpack.c.b16 %v105, %v104
  %v117 = vpack.c.b16 %v107, %v106
  %v118 = vpack.c.b16 %v109, %v108
  %v119 = vpack.c.b16 %v111, %v110
  %128 = vmatpush.bf16.msra.mxu0 %v119
  %129 = vmatpush.bf16.msra.mxu0 %v118
  %130 = vmatpush.bf16.msra.mxu0 %v117
  %131 = vmatpush.bf16.msra.mxu0 %v116
  %132 = vmatpush.bf16.msra.mxu0 %v115
  %133 = vmatpush.bf16.msra.mxu0 %v114
  %134 = vmatpush.bf16.msra.mxu0 %v113
  %135 = vmatpush.bf16.msra.mxu0 %v112
  %136 = vmatmul.bf16.gmra.mxu0 %v59
  %v137 = vpop.f32.mrf.mxu0
  %v138 = vadd.f32 %v78, %v137
  %v139 = vpop.f32.mrf.mxu0
  %v140 = vadd.f32 %v78, %v139
  %141 = vdwg.mxu0
  %v142 = vtanh.pop %v138
  %v143 = vtanh.pop %v140
  %v144 = vpack.c.bf16 %v143, %v142
  %v145 = vld [vmem:[%s5] sm:$0xf]
  %v146 = vld [vmem:[%s5 + $0x4] sm:$0xf]
  %v147 = vld [vmem:[%s5 + $0x8] sm:$0xf]
  %v148 = vld [vmem:[%s5 + $0xc] sm:$0xf]
  %v149 = vld [vmem:[%s5 + $0x10] sm:$0xf]
  %v150 = vld [vmem:[%s5 + $0x14] sm:$0xf]
  %v151 = vld [vmem:[%s5 + $0x18] sm:$0xf]
  %v152 = vld [vmem:[%s5 + $0x1c] sm:$0xf]
  %v153 = vld [vmem:[%s5 + $0x20] sm:$0xf]
  %v154 = vld [vmem:[%s5 + $0x24] sm:$0xf]
  %v155 = vld [vmem:[%s5 + $0x28] sm:$0xf]
  %v156 = vld [vmem:[%s5 + $0x2c] sm:$0xf]
  %v157 = vld [vmem:[%s5 + $0x30] sm:$0xf]
  %v158 = vld [vmem:[%s5 + $0x34] sm:$0xf]
  %v159 = vld [vmem:[%s5 + $0x38] sm:$0xf]
  %v160 = vld [vmem:[%s5 + $0x3c] sm:$0xf]
  %v161 = vld [vmem:[%s6] sm:$0x1]
  %v163 = vperm.slane %v161, 0
  %v181 = vunpack.c.l.b16 %v145
  %v182 = vunpack.c.l.b16 %v146
  %v183 = vunpack.c.l.b16 %v147
  %v184 = vunpack.c.l.b16 %v148
  %v185 = vunpack.c.l.b16 %v149
  %v186 = vunpack.c.l.b16 %v150
  %v187 = vunpack.c.l.b16 %v151
  %v188 = vunpack.c.l.b16 %v152
  %v189 = vunpack.c.l.b16 %v153
  %v190 = vunpack.c.l.b16 %v154
  %v191 = vunpack.c.l.b16 %v155
  %v192 = vunpack.c.l.b16 %v156
  %v193 = vunpack.c.l.b16 %v157
  %v194 = vunpack.c.l.b16 %v158
  %v195 = vunpack.c.l.b16 %v159
  %v196 = vunpack.c.l.b16 %v160
  %v197 = vpack.c.b16 %v182, %v181
  %v198 = vpack.c.b16 %v184, %v183
  %v199 = vpack.c.b16 %v186, %v185
  %v200 = vpack.c.b16 %v188, %v187
  %v201 = vpack.c.b16 %v190, %v189
  %v202 = vpack.c.b16 %v192, %v191
  %v203 = vpack.c.b16 %v194, %v193
  %v204 = vpack.c.b16 %v196, %v195
  %213 = vmatpush.bf16.msra.mxu0 %v204
  %214 = vmatpush.bf16.msra.mxu0 %v203
  %215 = vmatpush.bf16.msra.mxu0 %v202
  %216 = vmatpush.bf16.msra.mxu0 %v201
  %217 = vmatpush.bf16.msra.mxu0 %v200
  %218 = vmatpush.bf16.msra.mxu0 %v199
  %219 = vmatpush.bf16.msra.mxu0 %v198
  %220 = vmatpush.bf16.msra.mxu0 %v197
  %221 = vmatmul.bf16.gmra.mxu0 %v144
  %v222 = vpop.f32.mrf.mxu0
  %v223 = vadd.f32 %v163, %v222
  %v224 = vpop.f32.mrf.mxu0
  %v225 = vadd.f32 %v163, %v224
  %226 = vdwg.mxu0
  %vm227 = vcmask 15360
  %228 = vst.msk [vmem:[%s7] sm:$0xff] %vm227, %v223
  %229 = vst.msk [vmem:[%s7 + $0x8] sm:$0xff] %vm227, %v225
  // Predicated region
  $region30: #{tpu_custom_call.1} parent=0 // pred_check
    _
  $region31: #{tpu_custom_call.1} parent=0 // pred_check_branch
    %231 = sbr.rel (0) target = $region33
  $region32: #{tpu_custom_call.1} parent=0 // pred_region
    _
  $region33: #{tpu_custom_call.1} parent=0 // pred_fallthru
    _
  // Predicated region
  $region34: #{tpu_custom_call.1} parent=0 // pred_check
    _
  $region35: #{tpu_custom_call.1} parent=0 // pred_check_branch
    %233 = sbr.rel (0) target = $region37
  $region36: #{tpu_custom_call.1} parent=0 // pred_region
    _
  $region37: #{tpu_custom_call.1} parent=0 // pred_fallthru
    _

</llo_original>
